<compile_context>
chip_gen: v7x
topology: tpu7x:2x2x1
jax: 0.10.0
libtpu: 0.0.40
codegen_flags: <defaults>
</compile_context>

<pallas_src>
import jax
import jax.numpy as jnp
from jax.experimental import pallas as pl
from jax.experimental.pallas import tpu as pltpu


_MAX_BATCH_TILE = 8            # bound on images folded per grid step (static unroll)
_TARGET_STEP_BYTES = 4 << 20   # ~4 MiB of HBM traffic per grid step (high end of the
                               #   1-4 MiB range; v7x's ~2x HBM BW wants the high end)
_VMEM_BUDGET_BYTES = 20 << 20  # live double/triple-buffered blocks budget — safe under
                               #   the 32 MiB scoped default on every gen incl. v7x
_VMEM_LIMIT_BYTES = 32 << 20   # explicit scoped-VMEM limit (no-op on v7x, raises v5e)


def _round_down_128(x):
    return max(128, (x // 128) * 128)


def _largest_divisor_at_most(n, k):
    k = max(1, min(int(k), int(n)))
    for d in range(k, 0, -1):
        if n % d == 0:
            return d
    return 1


def _pick_tiles(n, cin, cout, hw, x_itemsize, out_itemsize):
    """Adaptive (batch tile, lane tile, hw-grid) so each step moves ~TARGET bytes."""
    bytes_per_lane = cin * x_itemsize + cout * out_itemsize          # HBM bytes / lane
    vmem_per_lane = 3 * cin * x_itemsize + 2 * cout * out_itemsize   # 3-buf x, 2-buf y
    lanes = min(_TARGET_STEP_BYTES // max(bytes_per_lane, 1),
                _VMEM_BUDGET_BYTES // max(vmem_per_lane, 1))
    lanes = int(max(128, lanes))

    if lanes >= hw:
        thw = hw                       # full spatial row: always a legal block dim
    else:
        thw = _round_down_128(lanes)   # 128-multiple tile; ragged tail is clipped on
                                       # writeback (no special-case single-block path)
    grid_hw = pl.cdiv(hw, thw)

    # Small H*W (late OFA stages): fold several images into one block so the per-step
    # DMA volume is not dominated by grid overhead / tiny transfers.
    bn = 1
    if grid_hw == 1:
        want = min(n, _MAX_BATCH_TILE, max(1, lanes // max(hw, 1)))
        if n > 1:
            want = min(want, n // 2)   # keep >=2 parallel steps for v7x's 2 TCs
        bn = _largest_divisor_at_most(n, want)

    # n == 1 with a single tile: split H*W so both v7x TensorCores get work.
    if (n // bn) * grid_hw < 2 and thw == hw and hw > 128:
        half = ((pl.cdiv(hw, 2) + 127) // 128) * 128
        if half < hw:
            thw = half
            grid_hw = pl.cdiv(hw, thw)

    return bn, thw, grid_hw


def dynamic_conv2d_1x1(x_nchw, weight_oihw, out_channel=None, *,
                       compute_dtype=None, out_dtype=None,
                       precision=jax.lax.Precision.HIGHEST):
    """Pallas equivalent of DynamicConv2d.forward (kernel_size=1, stride=1).

    x_nchw:       [N, Cin_active, H, W]  (NCHW kept native — no transposes)
    weight_oihw:  [max_out, max_in, 1, 1] full parameter tensor
    out_channel:  active output channels.  Must be a static Python int (one compile
                  per active width — the usual OFA usage pattern).
    compute_dtype: e.g. jnp.bfloat16 for bf16 MXU operands on v6e/v7x.  The x cast
                  happens inside the kernel (free VPU work, no extra HBM pass); only
                  the tiny weight is cast in the wrapper.  Leave None on v5e.
    out_dtype:    output dtype (default: x dtype).  Pass jnp.bfloat16 to cut the
                  dominant write stream if the consumer tolerates it.
    precision:    MXU precision for the dot; HIGHEST ~ PyTorch f32 conv parity and
                  is free (kernel is HBM-bound).
    """
    n, cin, h, w = x_nchw.shape
    max_out = weight_oihw.shape[0]
    if out_channel is None:
        out_channel = max_out
    cout = int(out_channel)
    # TODO(synk): only the module-default 1x1/stride-1/dilation-1 path is implemented.
    assert weight_oihw.shape[2] == 1 and weight_oihw.shape[3] == 1

    out_dtype = x_nchw.dtype if out_dtype is None else jnp.dtype(out_dtype)

    # Active filter as a [Cout, Cin] matrix (tiny slice; no pass over x).
    w_mat = weight_oihw[:cout, :cin, 0, 0]
    if compute_dtype is not None:
        w_mat = w_mat.astype(compute_dtype)      # weight only; x is cast in-kernel

    hw = h * w
    x_flat = x_nchw.reshape(n, cin, hw)          # free trailing-dim merge (NCHW kept)

    bn, thw, grid_hw = _pick_tiles(
        n, cin, cout, hw, x_flat.dtype.itemsize, jnp.dtype(out_dtype).itemsize)
    grid = (n // bn, grid_hw)

    def kernel(w_ref, x_ref, o_ref):
        wv = w_ref[...]
        # Static unroll over the (small) batch tile: one lane-dense matmul per image,
        # H*W on the lane axis -> unmasked stores.
        for b in range(bn):
            xv = x_ref[b]
            if compute_dtype is not None:
                xv = xv.astype(compute_dtype)    # in-kernel cast: free, no HBM pass
            acc = jnp.dot(wv, xv, preferred_element_type=jnp.float32,
                          precision=precision)
            o_ref[b] = acc.astype(o_ref.dtype)

    def run(use_pipeline_mode):
        if use_pipeline_mode:
            # x: 3-deep buffering hides DMA issue/completion behind the tiny per-step
            # matmul; weight: block index never changes -> single buffer (VMEM saver).
            w_spec = pl.BlockSpec((cout, cin), lambda ni, mi: (0, 0),
                                  pipeline_mode=pl.Buffered(1))
            x_spec = pl.BlockSpec((bn, cin, thw), lambda ni, mi: (ni, 0, mi),
                                  pipeline_mode=pl.Buffered(3))
        else:
            w_spec = pl.BlockSpec((cout, cin), lambda ni, mi: (0, 0))
            x_spec = pl.BlockSpec((bn, cin, thw), lambda ni, mi: (ni, 0, mi))
        out_spec = pl.BlockSpec((bn, cout, thw), lambda ni, mi: (ni, 0, mi))
        return pl.pallas_call(
            kernel,
            out_shape=jax.ShapeDtypeStruct((n, cout, hw), out_dtype),
            grid_spec=pltpu.PrefetchScalarGridSpec(
                num_scalar_prefetch=0,
                grid=grid,
                in_specs=[w_spec, x_spec],
                out_specs=out_spec,
            ),
            compiler_params=pltpu.CompilerParams(
                dimension_semantics=("parallel", "parallel"),
                vmem_limit_bytes=_VMEM_LIMIT_BYTES,
            ),
        )(w_mat, x_flat)

    try:
        y_flat = run(True)
    except Exception:
        # Portability fallback: jax versions without BlockSpec.pipeline_mode.
        # Default double-buffering is within a few % at equal block sizes.
        y_flat = run(False)

    # Free reshape back to NCHW.
    return y_flat.reshape(n, cout, h, w)


if __name__ == "__main__":
    # Module config (kernel_size=1, stride=1, dilation=1, bias=False)
    max_in_channels = 8
    max_out_channels = 16
    kernel_size = 1

    # Deterministic parameter init (kaiming-uniform-like scale)
    key = jax.random.PRNGKey(0)
    k_w, k_x = jax.random.split(key)
    fan_in = max_in_channels * kernel_size * kernel_size
    bound = (1.0 / fan_in) ** 0.5
    weight = jax.random.uniform(
        k_w,
        (max_out_channels, max_in_channels, kernel_size, kernel_size),
        dtype=jnp.float32, minval=-bound, maxval=bound,
    )

    # Input: NCHW, with an "active" in_channel slice (dynamic OFA width)
    n, cin_active, h, w = 2, 4, 16, 16
    out_channel_active = 12
    x = jax.random.normal(k_x, (n, cin_active, h, w), dtype=jnp.float32)

    y = dynamic_conv2d_1x1(x, weight, out_channel=out_channel_active)
    y = jax.block_until_ready(y)

    # Reference: sliced-filter 1x1 conv as an einsum at full f32 precision,
    # matching the kernel's precision=HIGHEST default.
    w_act = weight[:out_channel_active, :cin_active, 0, 0]
    y_ref = jnp.einsum("oc,nchw->nohw", w_act, x,
                       precision=jax.lax.Precision.HIGHEST)
    assert y.shape == (n, out_channel_active, h, w)
    assert jnp.allclose(y, y_ref, atol=1e-5, rtol=1e-5), float(
        jnp.max(jnp.abs(y - y_ref)))

    print("KERNEL_OK")
</pallas_src>

<mosaic_0001>
module attributes {stable_mosaic.version = 11 : i64} {
  func.func @kernel(%arg0: i32, %arg1: i32, %arg2: memref<12x4xf32, #tpu.memory_space<vmem>>, %arg3: memref<1x4x256xf32, #tpu.memory_space<vmem>>, %arg4: memref<1x12x256xf32, #tpu.memory_space<vmem>>) attributes {dimension_semantics = [#tpu.dimension_semantics<parallel>, #tpu.dimension_semantics<parallel>], iteration_bounds = array<i64: 2, 1>, scalar_prefetch = 0 : i64, scratch_operands = 0 : i64, tpu.core_type = #tpu.core_type<tc>, window_params = [{pipeline_mode = #tpu.pipeline_mode<synchronous>, transform_indices = @transform_0, window_bounds = array<i64: 12, 4>}, {transform_indices = @transform_1, window_bounds = array<i64: 1, 4, 256>}, {transform_indices = @transform_2, window_bounds = array<i64: 1, 12, 256>}]} {
    %c0 = arith.constant 0 : index
    %c0_0 = arith.constant 0 : index
    %0 = vector.load %arg2[%c0, %c0_0] : memref<12x4xf32, #tpu.memory_space<vmem>>, vector<12x4xf32>
    %c0_1 = arith.constant 0 : index
    %c0_2 = arith.constant 0 : index
    %c0_3 = arith.constant 0 : index
    %1 = vector.load %arg3[%c0_1, %c0_2, %c0_3] : memref<1x4x256xf32, #tpu.memory_space<vmem>>, vector<1x4x256xf32>
    %2 = vector.shape_cast %1 : vector<1x4x256xf32> to vector<4x256xf32>
    %cst = arith.constant dense<0.000000e+00> : vector<12x256xf32>
    %3 = tpu.matmul %0, %2, %cst {dimension_numbers = #tpu.dot_dimension_numbers<[1], [0], [0], [1], [0, 0, 1, 1], [], []>, precision = #tpu.contract_precision<fp32>} : vector<12x4xf32>, vector<4x256xf32>, vector<12x256xf32> -> vector<12x256xf32>
    %c0_4 = arith.constant 0 : index
    %c0_5 = arith.constant 0 : index
    %c0_6 = arith.constant 0 : index
    %4 = vector.load %arg4[%c0_4, %c0_5, %c0_6] : memref<1x12x256xf32, #tpu.memory_space<vmem>>, vector<1x12x256xf32>
    %5 = vector.shape_cast %4 : vector<1x12x256xf32> to vector<12x256xf32>
    %6 = vector.shape_cast %3 : vector<12x256xf32> to vector<1x12x256xf32>
    tpu.vector_store %arg4[%c0_4, %c0_5, %c0_6], %6 {strides = array<i32>} : memref<1x12x256xf32, #tpu.memory_space<vmem>>, vector<1x12x256xf32>,
    return
  }
  func.func @transform_0(%arg0: i32, %arg1: i32) -> (i32, i32) {
    %c0_i32 = arith.constant 0 : i32
    %c0_i32_0 = arith.constant 0 : i32
    %c0_i32_1 = arith.constant 0 : i32
    return %c0_i32, %c0_i32_0 : i32, i32
  }
  func.func @transform_1(%arg0: i32, %arg1: i32) -> (i32, i32, i32) {
    %c0_i32 = arith.constant 0 : i32
    %c0_i32_0 = arith.constant 0 : i32
    return %arg0, %c0_i32, %arg1 : i32, i32, i32
  }
  func.func @transform_2(%arg0: i32, %arg1: i32) -> (i32, i32, i32) {
    %c0_i32 = arith.constant 0 : i32
    %c0_i32_0 = arith.constant 0 : i32
    return %arg0, %c0_i32, %arg1 : i32, i32, i32
  }
}

</mosaic_0001>

<llo_original>
// kernel: tpu_custom_call.1
$region0: #{tpu_custom_call.1}
  #allocation0 [shape = 'u32[]', space=smem, size = 0x4, offset = 0x4, fixed_abs, tag = 'smem constant byte address 0x4 - core index']
  #allocation1 [shape = 'u32[144,128]{1,0:T(1,128)}', space=vmem, size = 0x12000, scoped, tag = 'internal scratch']
  %s0 = inlined_call_operand.vmem [shape: f32[12,4], index: 0, kind: input, shape index: {}]
  %s1 = inlined_call_operand.vmem [shape: f32[2,4,256], index: 1, kind: input, shape index: {}]
  %s2 = inlined_call_operand.vmem [shape: f32[2,12,256], index: 2, kind: output, shape index: {}]
  %s3 = sld [smem:[#allocation0]]
  $region41: #{tpu_custom_call.1} parent=0
    _
  %s5 = ssub.s32 1, %s3
  %s6 = scalar_select 0, %s5, %s3
  loop: start=0, step=1, limit=4
  $region2: #{tpu_custom_call.1} parent=0 // loop_pre_header
    _
  $region3: #{tpu_custom_call.1} parent=0 // loop_header
    %s8 = sphi 0, %s12
    %p9 = scmp.ge.s32.totalorder %s8, 4
    %s15 = sphi 0, %s27
    %s16 = sphi 0, %s23
    %s17 = sphi 0, %s15
    %s18 = sphi 0, %s16
    %s19 = sphi 0, %s17
    %s20 = sphi 0, %s18
    %s28 = sphi 0, %s28
    %s30 = sphi 0, %s28
    %s31 = sphi 0, %s30
    %s45 = sphi 0, %s31
    %s53 = sphi 0, %s55
    %s56 = sphi 0, %s53
    %s57 = sphi 0, %s56
    %s73 = sphi 0, %s57
    %s81 = sphi 0, %s83
    %s84 = sphi 0, %s81
    %s85 = sphi 0, %s84
    %s101 = sphi 0, %s85
  $region4: #{tpu_custom_call.1} parent=0 // loop_header_branch
    %11 = sbr.rel (%p9) target = $region8
  $region5: #{tpu_custom_call.1} parent=0 // loop_body
    %s13 = ssub.s32 %s8, 1
    %s14 = ssub.s32 %s8, 2
    %s21 = sadd.s32 1, %s16
    %p22 = scmp.ge.s32.totalorder %s21, 1
    %s23 = scalar_select %p22, 0, %s21
    %s24 = sadd.s32 1, %s15
    %s25 = scalar_select %p22, %s24, %s15
    %p26 = scmp.ge.s32.totalorder %s25, 2
    %s27 = scalar_select %p26, 0, %s25
    %s29 = sadd.s32 %s28, 1
    %p32 = scmp.eq.s32.totalorder %s8, 1
    %p33 = scmp.ne.s32.totalorder %s28, %s30
    %p34 = scmp.eq.s32.totalorder %s8, 0
    %p35 = por %p33, %p34
    %p36 = scmp.ne.s32.totalorder %s28, %s30
    %p37 = scmp.eq.s32.totalorder %s13, 1
    %p38 = por %p36, %p37
    %p39 = scmp.ne.s32.totalorder %s30, %s31
    %p40 = scmp.eq.s32.totalorder %s13, 0
    %p41 = por %p39, %p40
    %p42 = scmp.ne.s32.totalorder %s30, %s31
    %p43 = scmp.eq.s32.totalorder %s14, 1
    %p44 = por %p42, %p43
    %p46 = scmp.ne.s32.totalorder %s31, %s45
    %p47 = scmp.eq.s32.totalorder %s14, 0
    %p48 = por %p46, %p47
    %s49 = ssub.s32 %s15, %s27
    %s50 = ssub.s32 %s16, %s23
    %s51 = sor.u32 %s49, %s50
    %p52 = scmp.eq.s32.totalorder %s51, 0
    %s54 = sadd.s32 %s53, 1
    %s55 = scalar_select %p52, %s53, %s54
    %p58 = pneg %p52
    %p59 = scmp.eq.s32.totalorder %s8, 1
    %p60 = por %p58, %p59
    %p61 = scmp.ne.s32.totalorder %s53, %s56
    %p62 = scmp.eq.s32.totalorder %s8, 0
    %p63 = por %p61, %p62
    %p64 = scmp.ne.s32.totalorder %s53, %s56
    %p65 = scmp.eq.s32.totalorder %s13, 1
    %p66 = por %p64, %p65
    %p67 = scmp.ne.s32.totalorder %s56, %s57
    %p68 = scmp.eq.s32.totalorder %s13, 0
    %p69 = por %p67, %p68
    %p70 = scmp.ne.s32.totalorder %s56, %s57
    %p71 = scmp.eq.s32.totalorder %s14, 1
    %p72 = por %p70, %p71
    %p74 = scmp.ne.s32.totalorder %s57, %s73
    %p75 = scmp.eq.s32.totalorder %s14, 0
    %p76 = por %p74, %p75
    %s77 = ssub.s32 %s15, %s27
    %s78 = ssub.s32 %s16, %s23
    %s79 = sor.u32 %s77, %s78
    %p80 = scmp.eq.s32.totalorder %s79, 0
    %s82 = sadd.s32 %s81, 1
    %s83 = scalar_select %p80, %s81, %s82
    %p86 = pneg %p80
    %p87 = scmp.eq.s32.totalorder %s8, 1
    %p88 = por %p86, %p87
    %p89 = scmp.ne.s32.totalorder %s81, %s84
    %p90 = scmp.eq.s32.totalorder %s8, 0
    %p91 = por %p89, %p90
    %p92 = scmp.ne.s32.totalorder %s81, %s84
    %p93 = scmp.eq.s32.totalorder %s13, 1
    %p94 = por %p92, %p93
    %p95 = scmp.ne.s32.totalorder %s84, %s85
    %p96 = scmp.eq.s32.totalorder %s13, 0
    %p97 = por %p95, %p96
    %p98 = scmp.ne.s32.totalorder %s84, %s85
    %p99 = scmp.eq.s32.totalorder %s14, 1
    %p100 = por %p98, %p99
    %p102 = scmp.ne.s32.totalorder %s85, %s101
    %p103 = scmp.eq.s32.totalorder %s14, 0
    %p104 = por %p102, %p103
    %p105 = scmp.le.s32.totalorder 1, %s8
    %p106 = scmp.lt.s32.totalorder %s8, 3
    %p107 = pnand %p105, %p106
    %p108 = pneg %p107
    // Predicated region
    $region9: #{tpu_custom_call.1} parent=5 // pred_check
      _
    $region10: #{tpu_custom_call.1} parent=5 // pred_check_branch
      %110 = sbr.rel (%p107) target = $region12
    $region11: #{tpu_custom_call.1} parent=5 // pred_region
      %s111 = ssub.s32 %s8, 1
      // Predicated region
      $region13: #{tpu_custom_call.1} parent=11 // pred_check
        %p112 = pneg %p41
      $region14: #{tpu_custom_call.1} parent=11 // pred_check_branch
        %114 = sbr.rel (%p112) target = $region16
      $region15: #{tpu_custom_call.1} parent=11 // pred_region
        _
      $region16: #{tpu_custom_call.1} parent=11 // pred_fallthru
        _
    $region12: #{tpu_custom_call.1} parent=5 // pred_fallthru
      _
    %p115 = scmp.lt.s32.totalorder %s8, 2
    // Predicated region
    $region17: #{tpu_custom_call.1} parent=5 // pred_check
      %p116 = pneg %p115
    $region18: #{tpu_custom_call.1} parent=5 // pred_check_branch
      %118 = sbr.rel (%p116) target = $region20
    $region19: #{tpu_custom_call.1} parent=5 // pred_region
      // Predicated region
      $region21: #{tpu_custom_call.1} parent=19 // pred_check
        %p119 = pneg %p63
      $region22: #{tpu_custom_call.1} parent=19 // pred_check_branch
        %121 = sbr.rel (%p119) target = $region24
      $region23: #{tpu_custom_call.1} parent=19 // pred_region
        %s122 = smul.u32 2, %s16
        %p123 = scmp.lt.s32.totalorder %s15, 1
        %s124 = scalar_select %p123, %s15, 1
        %p125 = scmp.lt.s32.totalorder %s122, 1
        %s126 = scalar_select %p125, %s122, 1
        %s127 = smul.addr %s124, 2
        %s128 = sadd.s32 %s126, %s127
        %s129 = smul.addr %s128, 4
        %s130 = scalar_lea.vmem %s1, %s129
        %s131 = smul.u32 2, %s16
      $region24: #{tpu_custom_call.1} parent=19 // pred_fallthru
        _
    $region20: #{tpu_custom_call.1} parent=5 // pred_fallthru
      _
    %p132 = scmp.le.s32.totalorder 1, %s8
    %p133 = scmp.lt.s32.totalorder %s8, 3
    %p134 = pnand %p132, %p133
    %p135 = pneg %p134
    // Predicated region
    $region25: #{tpu_custom_call.1} parent=5 // pred_check
      _
    $region26: #{tpu_custom_call.1} parent=5 // pred_check_branch
      %137 = sbr.rel (%p134) target = $region28
    $region27: #{tpu_custom_call.1} parent=5 // pred_region
      %s138 = ssub.s32 %s8, 1
      %p139 = pneg %p41
      %p140 = pneg %p38
      %s141 = smul.u32 2, %s18
      %p142 = scmp.lt.s32.totalorder %s17, 1
      %s143 = scalar_select %p142, %s17, 1
      %p144 = scmp.lt.s32.totalorder %s141, 1
      %s145 = scalar_select %p144, %s141, 1
      %s146 = smul.addr %s143, 2
      %s147 = sadd.s32 %s145, %s146
      %s148 = smul.addr %s147, 4
      %s149 = scalar_lea.vmem %s1, %s148
      %p150 = pneg %p69
      %p151 = pneg %p66
      %p152 = pneg %p97
      %p153 = pneg %p94
      %s154 = smul.u32 2, %s18
      %p155 = scmp.lt.s32.totalorder %s17, 1
      %s156 = scalar_select %p155, %s17, 1
      %p157 = scmp.lt.s32.totalorder %s154, 1
      %s158 = scalar_select %p157, %s154, 1
      %s159 = smul.addr %s156, 4
      %s160 = sadd.s32 %s158, %s159
      %s161 = smul.addr %s160, 8
      %s162 = scalar_lea.vmem %s2, %s161
      %s163 = smul.u32 2, %s18
      %p164 = scmp.lt.s32.totalorder %s17, 1
      %s165 = scalar_select %p164, %s17, 1
      %p166 = scmp.lt.s32.totalorder %s163, 1
      %s167 = scalar_select %p166, %s163, 1
      %s168 = smul.addr %s165, 2
      %s169 = sadd.s32 %s167, %s168
      %s170 = smul.addr %s169, 4
      %s171 = scalar_lea.vmem %s1, %s170
      %s172 = smul.u32 2, %s18
      %s173 = smul.u32 2, %s18
      %p174 = scmp.lt.s32.totalorder %s17, 1
      %s175 = scalar_select %p174, %s17, 1
      %p176 = scmp.lt.s32.totalorder %s173, 1
      %s177 = scalar_select %p176, %s173, 1
      %s178 = smul.addr %s175, 4
      %s179 = sadd.s32 %s177, %s178
      %s180 = smul.addr %s179, 8
      %s181 = scalar_lea.vmem %s2, %s180
      %s182 = smul.u32 2, %s18
      %v183 = vld [vmem:[%s0] sm:$0xff]
      %v184 = vld [vmem:[%s0 + $0x8] sm:$0xf]
      %v185 = vld [vmem:[%s171] sm:$0xff]
      %v187 = vcombine.high %v185, %v185
      %vm188 = vcmask 31744
      %v190 = vsel %vm188, %v183, 0
      %v193 = vsel %vm188, %v184, 0
      %vm195 = vcmask 1043456
      %v196 = vsel %vm195, %v185, 0
      %v198 = vsel %vm195, %v187, 0
      %v200 = vand.u32 %v198, 4294901760
      %201 = vmatprep.subr.mxu0 %v200
      %v202 = vand.u32 %v196, 4294901760
      %203 = vmatpush1.msra.mxu0 %v202
      %204 = vmatprep.subr.mxu0 0.0
      %205 = vmatpush1.msra.mxu0 0.0
      %206 = vmatprep.subr.mxu0 0.0
      %207 = vmatpush1.msra.mxu0 0.0
      %208 = vmatprep.subr.mxu0 0.0
      %209 = vmatpush1.msra.mxu0 0.0
      %210 = vmatprep.subr.mxu0 0.0
      %211 = vmatpush1.msra.mxu0 0.0
      %212 = vmatprep.subr.mxu0 0.0
      %213 = vmatpush1.msra.mxu0 0.0
      %214 = vmatprep.subr.mxu0 0.0
      %215 = vmatpush1.msra.mxu0 0.0
      %216 = vmatprep.subr.mxu0 0.0
      %217 = vmatpush1.msra.mxu0 0.0
      %218 = vmatprep.subr.mxu0 0.0
      %219 = vmatpush1.msra.mxu0 0.0
      %220 = vmatprep.subr.mxu0 0.0
      %221 = vmatpush1.msra.mxu0 0.0
      %222 = vmatprep.subr.mxu0 0.0
      %223 = vmatpush1.msra.mxu0 0.0
      %224 = vmatprep.subr.mxu0 0.0
      %225 = vmatpush1.msra.mxu0 0.0
      %226 = vmatprep.subr.mxu0 0.0
      %227 = vmatpush1.msra.mxu0 0.0
      %228 = vmatprep.subr.mxu0 0.0
      %229 = vmatpush1.msra.mxu0 0.0
      %230 = vmatprep.subr.mxu0 0.0
      %231 = vmatpush1.msra.mxu0 0.0
      %232 = vmatprep.subr.mxu0 0.0
      %233 = vmatpush1.msra.mxu0 0.0
      %234 = vmatprep.subr.mxu0 0.0
      %235 = vmatpush1.msra.mxu0 0.0
      %236 = vmatprep.subr.mxu0 0.0
      %237 = vmatpush1.msra.mxu0 0.0
      %238 = vmatprep.subr.mxu0 0.0
      %239 = vmatpush1.msra.mxu0 0.0
      %240 = vmatprep.subr.mxu0 0.0
      %241 = vmatpush1.msra.mxu0 0.0
      %242 = vmatprep.subr.mxu0 0.0
      %243 = vmatpush1.msra.mxu0 0.0
      %244 = vmatprep.subr.mxu0 0.0
      %245 = vmatpush1.msra.mxu0 0.0
      %246 = vmatprep.subr.mxu0 0.0
      %247 = vmatpush1.msra.mxu0 0.0
      %248 = vmatprep.subr.mxu0 0.0
      %249 = vmatpush1.msra.mxu0 0.0
      %250 = vmatprep.subr.mxu0 0.0
      %251 = vmatpush1.msra.mxu0 0.0
      %252 = vmatprep.subr.mxu0 0.0
      %253 = vmatpush1.msra.mxu0 0.0
      %254 = vmatprep.subr.mxu0 0.0
      %255 = vmatpush1.msra.mxu0 0.0
      %256 = vmatprep.subr.mxu0 0.0
      %257 = vmatpush1.msra.mxu0 0.0
      %258 = vmatprep.subr.mxu0 0.0
      %259 = vmatpush1.msra.mxu0 0.0
      %260 = vmatprep.subr.mxu0 0.0
      %261 = vmatpush1.msra.mxu0 0.0
      %262 = vmatprep.subr.mxu0 0.0
      %263 = vmatpush1.msra.mxu0 0.0
      %264 = vmatprep.subr.mxu0 0.0
      %265 = vmatpush1.msra.mxu0 0.0
      %266 = vmatprep.mubr.f32.mxu0 0.0
      %v267 = vand.u32 %v190, 4294901760
      %v268 = vsub.f32 %v190, %v267
      %v269 = vand.u32 %v268, 4294901760
      %v270 = vsub.f32 %v268, %v269
      %v271 = vand.u32 %v270, 4294901760
      %272 = vmatmul.mubr.f32.gmra.mrb[0].mxu0 %v271
      %v273 = vpop.f32.mrb[0].mxu0
      %v274 = vadd.f32 0.0, %v273
      %v275 = vpop.f32.mrb[0].mxu0
      %v276 = vadd.f32 0.0, %v275
      %277 = vmatprep.mubr.f32.mxu0 0.0
      %v278 = vand.u32 %v193, 4294901760
      %v279 = vsub.f32 %v193, %v278
      %v280 = vand.u32 %v279, 4294901760
      %v281 = vsub.f32 %v279, %v280
      %v282 = vand.u32 %v281, 4294901760
      %283 = vmatmul.mubr.f32.gmra.mrb[0].mxu0 %v282
      %v284 = vpop.f32.mrb[0].mxu0
      %v285 = vadd.f32 0.0, %v284
      %v286 = vpop.f32.mrb[0].mxu0
      %v287 = vadd.f32 0.0, %v286
      %288 = vdwg.mxu0
      %v289 = vand.u32 %v198, 4294901760
      %v290 = vsub.f32 %v198, %v289
      %v291 = vand.u32 %v290, 4294901760
      %v292 = vsub.f32 %v290, %v291
      %v293 = vand.u32 %v292, 4294901760
      %294 = vmatprep.subr.mxu0 %v293
      %v295 = vand.u32 %v196, 4294901760
      %v296 = vsub.f32 %v196, %v295
      %v297 = vand.u32 %v296, 4294901760
      %v298 = vsub.f32 %v296, %v297
      %v299 = vand.u32 %v298, 4294901760
      %300 = vmatpush1.msra.mxu0 %v299
      %301 = vmatprep.subr.mxu0 0.0
      %302 = vmatpush1.msra.mxu0 0.0
      %303 = vmatprep.subr.mxu0 0.0
      %304 = vmatpush1.msra.mxu0 0.0
      %305 = vmatprep.subr.mxu0 0.0
      %306 = vmatpush1.msra.mxu0 0.0
      %307 = vmatprep.subr.mxu0 0.0
      %308 = vmatpush1.msra.mxu0 0.0
      %309 = vmatprep.subr.mxu0 0.0
      %310 = vmatpush1.msra.mxu0 0.0
      %311 = vmatprep.subr.mxu0 0.0
      %312 = vmatpush1.msra.mxu0 0.0
      %313 = vmatprep.subr.mxu0 0.0
      %314 = vmatpush1.msra.mxu0 0.0
      %315 = vmatprep.subr.mxu0 0.0
      %316 = vmatpush1.msra.mxu0 0.0
      %317 = vmatprep.subr.mxu0 0.0
      %318 = vmatpush1.msra.mxu0 0.0
      %319 = vmatprep.subr.mxu0 0.0
      %320 = vmatpush1.msra.mxu0 0.0
      %321 = vmatprep.subr.mxu0 0.0
      %322 = vmatpush1.msra.mxu0 0.0
      %323 = vmatprep.subr.mxu0 0.0
      %324 = vmatpush1.msra.mxu0 0.0
      %325 = vmatprep.subr.mxu0 0.0
      %326 = vmatpush1.msra.mxu0 0.0
      %327 = vmatprep.subr.mxu0 0.0
      %328 = vmatpush1.msra.mxu0 0.0
      %329 = vmatprep.subr.mxu0 0.0
      %330 = vmatpush1.msra.mxu0 0.0
      %331 = vmatprep.subr.mxu0 0.0
      %332 = vmatpush1.msra.mxu0 0.0
      %333 = vmatprep.subr.mxu0 0.0
      %334 = vmatpush1.msra.mxu0 0.0
      %335 = vmatprep.subr.mxu0 0.0
      %336 = vmatpush1.msra.mxu0 0.0
      %337 = vmatprep.subr.mxu0 0.0
      %338 = vmatpush1.msra.mxu0 0.0
      %339 = vmatprep.subr.mxu0 0.0
      %340 = vmatpush1.msra.mxu0 0.0
      %341 = vmatprep.subr.mxu0 0.0
      %342 = vmatpush1.msra.mxu0 0.0
      %343 = vmatprep.subr.mxu0 0.0
      %344 = vmatpush1.msra.mxu0 0.0
      %345 = vmatprep.subr.mxu0 0.0
      %346 = vmatpush1.msra.mxu0 0.0
      %347 = vmatprep.subr.mxu0 0.0
      %348 = vmatpush1.msra.mxu0 0.0
      %349 = vmatprep.subr.mxu0 0.0
      %350 = vmatpush1.msra.mxu0 0.0
      %351 = vmatprep.subr.mxu0 0.0
      %352 = vmatpush1.msra.mxu0 0.0
      %353 = vmatprep.subr.mxu0 0.0
      %354 = vmatpush1.msra.mxu0 0.0
      %355 = vmatprep.subr.mxu0 0.0
      %356 = vmatpush1.msra.mxu0 0.0
      %357 = vmatprep.subr.mxu0 0.0
      %358 = vmatpush1.msra.mxu0 0.0
      %359 = vmatprep.subr.mxu0 0.0
      %360 = vmatpush1.msra.mxu0 0.0
      %361 = vmatprep.subr.mxu0 0.0
      %362 = vmatpush1.msra.mxu0 0.0
      %363 = vmatprep.mubr.f32.mxu0 0.0
      %v364 = vand.u32 %v190, 4294901760
      %365 = vmatmul.mubr.f32.gmra.mrb[0].mxu0 %v364
      %v366 = vpop.f32.mrb[0].mxu0
      %v367 = vadd.f32 %v274, %v366
      %v368 = vpop.f32.mrb[0].mxu0
      %v369 = vadd.f32 %v276, %v368
      %370 = vmatprep.mubr.f32.mxu0 0.0
      %v371 = vand.u32 %v193, 4294901760
      %372 = vmatmul.mubr.f32.gmra.mrb[0].mxu0 %v371
      %v373 = vpop.f32.mrb[0].mxu0
      %v374 = vadd.f32 %v285, %v373
      %v375 = vpop.f32.mrb[0].mxu0
      %v376 = vadd.f32 %v287, %v375
      %377 = vdwg.mxu0
      %v378 = vand.u32 %v198, 4294901760
      %v379 = vsub.f32 %v198, %v378
      %380 = vmatprep.subr.mxu0 %v379
      %v381 = vand.u32 %v196, 4294901760
      %v382 = vsub.f32 %v196, %v381
      %383 = vmatpush1.msra.mxu0 %v382
      %384 = vmatprep.subr.mxu0 0.0
      %385 = vmatpush1.msra.mxu0 0.0
      %386 = vmatprep.subr.mxu0 0.0
      %387 = vmatpush1.msra.mxu0 0.0
      %388 = vmatprep.subr.mxu0 0.0
      %389 = vmatpush1.msra.mxu0 0.0
      %390 = vmatprep.subr.mxu0 0.0
      %391 = vmatpush1.msra.mxu0 0.0
      %392 = vmatprep.subr.mxu0 0.0
      %393 = vmatpush1.msra.mxu0 0.0
      %394 = vmatprep.subr.mxu0 0.0
      %395 = vmatpush1.msra.mxu0 0.0
      %396 = vmatprep.subr.mxu0 0.0
      %397 = vmatpush1.msra.mxu0 0.0
      %398 = vmatprep.subr.mxu0 0.0
      %399 = vmatpush1.msra.mxu0 0.0
      %400 = vmatprep.subr.mxu0 0.0
      %401 = vmatpush1.msra.mxu0 0.0
      %402 = vmatprep.subr.mxu0 0.0
      %403 = vmatpush1.msra.mxu0 0.0
      %404 = vmatprep.subr.mxu0 0.0
      %405 = vmatpush1.msra.mxu0 0.0
      %406 = vmatprep.subr.mxu0 0.0
      %407 = vmatpush1.msra.mxu0 0.0
      %408 = vmatprep.subr.mxu0 0.0
      %409 = vmatpush1.msra.mxu0 0.0
      %410 = vmatprep.subr.mxu0 0.0
      %411 = vmatpush1.msra.mxu0 0.0
      %412 = vmatprep.subr.mxu0 0.0
      %413 = vmatpush1.msra.mxu0 0.0
      %414 = vmatprep.subr.mxu0 0.0
      %415 = vmatpush1.msra.mxu0 0.0
      %416 = vmatprep.subr.mxu0 0.0
      %417 = vmatpush1.msra.mxu0 0.0
      %418 = vmatprep.subr.mxu0 0.0
      %419 = vmatpush1.msra.mxu0 0.0
      %420 = vmatprep.subr.mxu0 0.0
      %421 = vmatpush1.msra.mxu0 0.0
      %422 = vmatprep.subr.mxu0 0.0
      %423 = vmatpush1.msra.mxu0 0.0
      %424 = vmatprep.subr.mxu0 0.0
      %425 = vmatpush1.msra.mxu0 0.0
      %426 = vmatprep.subr.mxu0 0.0
      %427 = vmatpush1.msra.mxu0 0.0
      %428 = vmatprep.subr.mxu0 0.0
      %429 = vmatpush1.msra.mxu0 0.0
      %430 = vmatprep.subr.mxu0 0.0
      %431 = vmatpush1.msra.mxu0 0.0
      %432 = vmatprep.subr.mxu0 0.0
      %433 = vmatpush1.msra.mxu0 0.0
      %434 = vmatprep.subr.mxu0 0.0
      %435 = vmatpush1.msra.mxu0 0.0
      %436 = vmatprep.subr.mxu0 0.0
      %437 = vmatpush1.msra.mxu0 0.0
      %438 = vmatprep.subr.mxu0 0.0
      %439 = vmatpush1.msra.mxu0 0.0
      %440 = vmatprep.subr.mxu0 0.0
      %441 = vmatpush1.msra.mxu0 0.0
      %442 = vmatprep.subr.mxu0 0.0
      %443 = vmatpush1.msra.mxu0 0.0
      %444 = vmatprep.subr.mxu0 0.0
      %445 = vmatpush1.msra.mxu0 0.0
      %446 = vmatprep.mubr.f32.mxu0 0.0
      %v447 = vand.u32 %v190, 4294901760
      %v448 = vsub.f32 %v190, %v447
      %449 = vmatmul.mubr.f32.gmra.mrb[0].mxu0 %v448
      %v450 = vpop.f32.mrb[0].mxu0
      %v451 = vadd.f32 %v367, %v450
      %v452 = vpop.f32.mrb[0].mxu0
      %v453 = vadd.f32 %v369, %v452
      %454 = vmatprep.mubr.f32.mxu0 0.0
      %v455 = vand.u32 %v193, 4294901760
      %v456 = vsub.f32 %v193, %v455
      %457 = vmatmul.mubr.f32.gmra.mrb[0].mxu0 %v456
      %v458 = vpop.f32.mrb[0].mxu0
      %v459 = vadd.f32 %v374, %v458
      %v460 = vpop.f32.mrb[0].mxu0
      %v461 = vadd.f32 %v376, %v460
      %462 = vdwg.mxu0
      %v463 = vand.u32 %v198, 4294901760
      %464 = vmatprep.subr.mxu0 %v463
      %v465 = vand.u32 %v196, 4294901760
      %466 = vmatpush1.msra.mxu0 %v465
      %467 = vmatprep.subr.mxu0 0.0
      %468 = vmatpush1.msra.mxu0 0.0
      %469 = vmatprep.subr.mxu0 0.0
      %470 = vmatpush1.msra.mxu0 0.0
      %471 = vmatprep.subr.mxu0 0.0
      %472 = vmatpush1.msra.mxu0 0.0
      %473 = vmatprep.subr.mxu0 0.0
      %474 = vmatpush1.msra.mxu0 0.0
      %475 = vmatprep.subr.mxu0 0.0
      %476 = vmatpush1.msra.mxu0 0.0
      %477 = vmatprep.subr.mxu0 0.0
      %478 = vmatpush1.msra.mxu0 0.0
      %479 = vmatprep.subr.mxu0 0.0
      %480 = vmatpush1.msra.mxu0 0.0
      %481 = vmatprep.subr.mxu0 0.0
      %482 = vmatpush1.msra.mxu0 0.0
      %483 = vmatprep.subr.mxu0 0.0
      %484 = vmatpush1.msra.mxu0 0.0
      %485 = vmatprep.subr.mxu0 0.0
      %486 = vmatpush1.msra.mxu0 0.0
      %487 = vmatprep.subr.mxu0 0.0
      %488 = vmatpush1.msra.mxu0 0.0
      %489 = vmatprep.subr.mxu0 0.0
      %490 = vmatpush1.msra.mxu0 0.0
      %491 = vmatprep.subr.mxu0 0.0
      %492 = vmatpush1.msra.mxu0 0.0
      %493 = vmatprep.subr.mxu0 0.0
      %494 = vmatpush1.msra.mxu0 0.0
      %495 = vmatprep.subr.mxu0 0.0
      %496 = vmatpush1.msra.mxu0 0.0
      %497 = vmatprep.subr.mxu0 0.0
      %498 = vmatpush1.msra.mxu0 0.0
      %499 = vmatprep.subr.mxu0 0.0
      %500 = vmatpush1.msra.mxu0 0.0
      %501 = vmatprep.subr.mxu0 0.0
      %502 = vmatpush1.msra.mxu0 0.0
      %503 = vmatprep.subr.mxu0 0.0
      %504 = vmatpush1.msra.mxu0 0.0
      %505 = vmatprep.subr.mxu0 0.0
      %506 = vmatpush1.msra.mxu0 0.0
      %507 = vmatprep.subr.mxu0 0.0
      %508 = vmatpush1.msra.mxu0 0.0
      %509 = vmatprep.subr.mxu0 0.0
      %510 = vmatpush1.msra.mxu0 0.0
      %511 = vmatprep.subr.mxu0 0.0
      %512 = vmatpush1.msra.mxu0 0.0
      %513 = vmatprep.subr.mxu0 0.0
      %514 = vmatpush1.msra.mxu0 0.0
      %515 = vmatprep.subr.mxu0 0.0
      %516 = vmatpush1.msra.mxu0 0.0
      %517 = vmatprep.subr.mxu0 0.0
      %518 = vmatpush1.msra.mxu0 0.0
      %519 = vmatprep.subr.mxu0 0.0
      %520 = vmatpush1.msra.mxu0 0.0
      %521 = vmatprep.subr.mxu0 0.0
      %522 = vmatpush1.msra.mxu0 0.0
      %523 = vmatprep.subr.mxu0 0.0
      %524 = vmatpush1.msra.mxu0 0.0
      %525 = vmatprep.subr.mxu0 0.0
      %526 = vmatpush1.msra.mxu0 0.0
      %527 = vmatprep.subr.mxu0 0.0
      %528 = vmatpush1.msra.mxu0 0.0
      %529 = vmatprep.mubr.f32.mxu0 0.0
      %v530 = vand.u32 %v190, 4294901760
      %v531 = vsub.f32 %v190, %v530
      %v532 = vand.u32 %v531, 4294901760
      %533 = vmatmul.mubr.f32.gmra.mrb[0].mxu0 %v532
      %v534 = vpop.f32.mrb[0].mxu0
      %v535 = vadd.f32 %v451, %v534
      %v536 = vpop.f32.mrb[0].mxu0
      %v537 = vadd.f32 %v453, %v536
      %538 = vmatprep.mubr.f32.mxu0 0.0
      %v539 = vand.u32 %v193, 4294901760
      %v540 = vsub.f32 %v193, %v539
      %v541 = vand.u32 %v540, 4294901760
      %542 = vmatmul.mubr.f32.gmra.mrb[0].mxu0 %v541
      %v543 = vpop.f32.mrb[0].mxu0
      %v544 = vadd.f32 %v459, %v543
      %v545 = vpop.f32.mrb[0].mxu0
      %v546 = vadd.f32 %v461, %v545
      %547 = vdwg.mxu0
      %v548 = vand.u32 %v198, 4294901760
      %v549 = vsub.f32 %v198, %v548
      %v550 = vand.u32 %v549, 4294901760
      %551 = vmatprep.subr.mxu0 %v550
      %v552 = vand.u32 %v196, 4294901760
      %v553 = vsub.f32 %v196, %v552
      %v554 = vand.u32 %v553, 4294901760
      %555 = vmatpush1.msra.mxu0 %v554
      %556 = vmatprep.subr.mxu0 0.0
      %557 = vmatpush1.msra.mxu0 0.0
      %558 = vmatprep.subr.mxu0 0.0
      %559 = vmatpush1.msra.mxu0 0.0
      %560 = vmatprep.subr.mxu0 0.0
      %561 = vmatpush1.msra.mxu0 0.0
      %562 = vmatprep.subr.mxu0 0.0
      %563 = vmatpush1.msra.mxu0 0.0
      %564 = vmatprep.subr.mxu0 0.0
      %565 = vmatpush1.msra.mxu0 0.0
      %566 = vmatprep.subr.mxu0 0.0
      %567 = vmatpush1.msra.mxu0 0.0
      %568 = vmatprep.subr.mxu0 0.0
      %569 = vmatpush1.msra.mxu0 0.0
      %570 = vmatprep.subr.mxu0 0.0
      %571 = vmatpush1.msra.mxu0 0.0
      %572 = vmatprep.subr.mxu0 0.0
      %573 = vmatpush1.msra.mxu0 0.0
      %574 = vmatprep.subr.mxu0 0.0
      %575 = vmatpush1.msra.mxu0 0.0
      %576 = vmatprep.subr.mxu0 0.0
      %577 = vmatpush1.msra.mxu0 0.0
      %578 = vmatprep.subr.mxu0 0.0
      %579 = vmatpush1.msra.mxu0 0.0
      %580 = vmatprep.subr.mxu0 0.0
      %581 = vmatpush1.msra.mxu0 0.0
      %582 = vmatprep.subr.mxu0 0.0
      %583 = vmatpush1.msra.mxu0 0.0
      %584 = vmatprep.subr.mxu0 0.0
      %585 = vmatpush1.msra.mxu0 0.0
      %586 = vmatprep.subr.mxu0 0.0
      %587 = vmatpush1.msra.mxu0 0.0
      %588 = vmatprep.subr.mxu0 0.0
      %589 = vmatpush1.msra.mxu0 0.0
      %590 = vmatprep.subr.mxu0 0.0
      %591 = vmatpush1.msra.mxu0 0.0
      %592 = vmatprep.subr.mxu0 0.0
      %593 = vmatpush1.msra.mxu0 0.0
      %594 = vmatprep.subr.mxu0 0.0
      %595 = vmatpush1.msra.mxu0 0.0
      %596 = vmatprep.subr.mxu0 0.0
      %597 = vmatpush1.msra.mxu0 0.0
      %598 = vmatprep.subr.mxu0 0.0
      %599 = vmatpush1.msra.mxu0 0.0
      %600 = vmatprep.subr.mxu0 0.0
      %601 = vmatpush1.msra.mxu0 0.0
      %602 = vmatprep.subr.mxu0 0.0
      %603 = vmatpush1.msra.mxu0 0.0
      %604 = vmatprep.subr.mxu0 0.0
      %605 = vmatpush1.msra.mxu0 0.0
      %606 = vmatprep.subr.mxu0 0.0
      %607 = vmatpush1.msra.mxu0 0.0
      %608 = vmatprep.subr.mxu0 0.0
      %609 = vmatpush1.msra.mxu0 0.0
      %610 = vmatprep.subr.mxu0 0.0
      %611 = vmatpush1.msra.mxu0 0.0
      %612 = vmatprep.subr.mxu0 0.0
      %613 = vmatpush1.msra.mxu0 0.0
      %614 = vmatprep.subr.mxu0 0.0
      %615 = vmatpush1.msra.mxu0 0.0
      %616 = vmatprep.subr.mxu0 0.0
      %617 = vmatpush1.msra.mxu0 0.0
      %618 = vmatprep.mubr.f32.mxu0 0.0
      %v619 = vand.u32 %v190, 4294901760
      %620 = vmatmul.mubr.f32.gmra.mrb[0].mxu0 %v619
      %v621 = vpop.f32.mrb[0].mxu0
      %v622 = vadd.f32 %v535, %v621
      %v623 = vpop.f32.mrb[0].mxu0
      %v624 = vadd.f32 %v537, %v623
      %625 = vmatprep.mubr.f32.mxu0 0.0
      %v626 = vand.u32 %v193, 4294901760
      %627 = vmatmul.mubr.f32.gmra.mrb[0].mxu0 %v626
      %v628 = vpop.f32.mrb[0].mxu0
      %v629 = vadd.f32 %v544, %v628
      %v630 = vpop.f32.mrb[0].mxu0
      %v631 = vadd.f32 %v546, %v630
      %632 = vdwg.mxu0
      %v633 = vand.u32 %v198, 4294901760
      %634 = vmatprep.subr.mxu0 %v633
      %v635 = vand.u32 %v196, 4294901760
      %636 = vmatpush1.msra.mxu0 %v635
      %637 = vmatprep.subr.mxu0 0.0
      %638 = vmatpush1.msra.mxu0 0.0
      %639 = vmatprep.subr.mxu0 0.0
      %640 = vmatpush1.msra.mxu0 0.0
      %641 = vmatprep.subr.mxu0 0.0
      %642 = vmatpush1.msra.mxu0 0.0
      %643 = vmatprep.subr.mxu0 0.0
      %644 = vmatpush1.msra.mxu0 0.0
      %645 = vmatprep.subr.mxu0 0.0
      %646 = vmatpush1.msra.mxu0 0.0
      %647 = vmatprep.subr.mxu0 0.0
      %648 = vmatpush1.msra.mxu0 0.0
      %649 = vmatprep.subr.mxu0 0.0
      %650 = vmatpush1.msra.mxu0 0.0
      %651 = vmatprep.subr.mxu0 0.0
      %652 = vmatpush1.msra.mxu0 0.0
      %653 = vmatprep.subr.mxu0 0.0
      %654 = vmatpush1.msra.mxu0 0.0
      %655 = vmatprep.subr.mxu0 0.0
      %656 = vmatpush1.msra.mxu0 0.0
      %657 = vmatprep.subr.mxu0 0.0
      %658 = vmatpush1.msra.mxu0 0.0
      %659 = vmatprep.subr.mxu0 0.0
      %660 = vmatpush1.msra.mxu0 0.0
      %661 = vmatprep.subr.mxu0 0.0
      %662 = vmatpush1.msra.mxu0 0.0
      %663 = vmatprep.subr.mxu0 0.0
      %664 = vmatpush1.msra.mxu0 0.0
      %665 = vmatprep.subr.mxu0 0.0
      %666 = vmatpush1.msra.mxu0 0.0
      %667 = vmatprep.subr.mxu0 0.0
      %668 = vmatpush1.msra.mxu0 0.0
      %669 = vmatprep.subr.mxu0 0.0
      %670 = vmatpush1.msra.mxu0 0.0
      %671 = vmatprep.subr.mxu0 0.0
      %672 = vmatpush1.msra.mxu0 0.0
      %673 = vmatprep.subr.mxu0 0.0
      %674 = vmatpush1.msra.mxu0 0.0
      %675 = vmatprep.subr.mxu0 0.0
      %676 = vmatpush1.msra.mxu0 0.0
      %677 = vmatprep.subr.mxu0 0.0
      %678 = vmatpush1.msra.mxu0 0.0
      %679 = vmatprep.subr.mxu0 0.0
      %680 = vmatpush1.msra.mxu0 0.0
      %681 = vmatprep.subr.mxu0 0.0
      %682 = vmatpush1.msra.mxu0 0.0
      %683 = vmatprep.subr.mxu0 0.0
      %684 = vmatpush1.msra.mxu0 0.0
      %685 = vmatprep.subr.mxu0 0.0
      %686 = vmatpush1.msra.mxu0 0.0
      %687 = vmatprep.subr.mxu0 0.0
      %688 = vmatpush1.msra.mxu0 0.0
      %689 = vmatprep.subr.mxu0 0.0
      %690 = vmatpush1.msra.mxu0 0.0
      %691 = vmatprep.subr.mxu0 0.0
      %692 = vmatpush1.msra.mxu0 0.0
      %693 = vmatprep.subr.mxu0 0.0
      %694 = vmatpush1.msra.mxu0 0.0
      %695 = vmatprep.subr.mxu0 0.0
      %696 = vmatpush1.msra.mxu0 0.0
      %697 = vmatprep.subr.mxu0 0.0
      %698 = vmatpush1.msra.mxu0 0.0
      %699 = vmatprep.mubr.f32.mxu0 0.0
      %v700 = vand.u32 %v190, 4294901760
      %701 = vmatmul.mubr.f32.gmra.mrb[0].mxu0 %v700
      %v702 = vpop.f32.mrb[0].mxu0
      %v703 = vadd.f32 %v622, %v702
      %v704 = vpop.f32.mrb[0].mxu0
      %v705 = vadd.f32 %v624, %v704
      %706 = vmatprep.mubr.f32.mxu0 0.0
      %v707 = vand.u32 %v193, 4294901760
      %708 = vmatmul.mubr.f32.gmra.mrb[0].mxu0 %v707
      %v709 = vpop.f32.mrb[0].mxu0
      %v710 = vadd.f32 %v629, %v709
      %v711 = vpop.f32.mrb[0].mxu0
      %v712 = vadd.f32 %v631, %v711
      %713 = vdwg.mxu0
      %714 = vst [vmem:[%s181] sm:$0xff] %v703
      %715 = vst [vmem:[%s181 + $0x8] sm:$0xff] %v705
      %716 = vst [vmem:[%s181 + $0x10] sm:$0xf] %v710
      %717 = vst [vmem:[%s181 + $0x18] sm:$0xf] %v712
      %s718 = smul.u32 2, %s18
      %p719 = scmp.lt.s32.totalorder %s17, 1
      %s720 = scalar_select %p719, %s17, 1
      %p721 = scmp.lt.s32.totalorder %s718, 1
      %s722 = scalar_select %p721, %s718, 1
      %s723 = smul.addr %s720, 4
      %s724 = sadd.s32 %s722, %s723
      %s725 = smul.addr %s724, 8
      %s726 = scalar_lea.vmem %s2, %s725
      // Predicated region
      $region29: #{tpu_custom_call.1} parent=27 // pred_check
        %p727 = pneg %p94
      $region30: #{tpu_custom_call.1} parent=27 // pred_check_branch
        %729 = sbr.rel (%p727) target = $region32
      $region31: #{tpu_custom_call.1} parent=27 // pred_region
        %s730 = smul.u32 2, %s18
      $region32: #{tpu_custom_call.1} parent=27 // pred_fallthru
        _
    $region28: #{tpu_custom_call.1} parent=5 // pred_fallthru
      _
    %p731 = scmp.le.s32.totalorder 2, %s8
    // Predicated region
    $region33: #{tpu_custom_call.1} parent=5 // pred_check
      %p732 = pneg %p731
    $region34: #{tpu_custom_call.1} parent=5 // pred_check_branch
      %734 = sbr.rel (%p732) target = $region36
    $region35: #{tpu_custom_call.1} parent=5 // pred_region
      %s735 = ssub.s32 %s8, 2
      // Predicated region
      $region37: #{tpu_custom_call.1} parent=35 // pred_check
        %p736 = pneg %p100
      $region38: #{tpu_custom_call.1} parent=35 // pred_check_branch
        %738 = sbr.rel (%p736) target = $region40
      $region39: #{tpu_custom_call.1} parent=35 // pred_region
        %s739 = smul.u32 2, %s20
        %p740 = scmp.lt.s32.totalorder %s19, 1
        %s741 = scalar_select %p740, %s19, 1
        %p742 = scmp.lt.s32.totalorder %s739, 1
        %s743 = scalar_select %p742, %s739, 1
        %s744 = smul.addr %s741, 4
        %s745 = sadd.s32 %s743, %s744
        %s746 = smul.addr %s745, 8
        %s747 = scalar_lea.vmem %s2, %s746
      $region40: #{tpu_custom_call.1} parent=35 // pred_fallthru
        _
    $region36: #{tpu_custom_call.1} parent=5 // pred_fallthru
      _
  $region6: #{tpu_custom_call.1} parent=0 // loop_footer
    %s12 = sadd.s32 1, %s8
  $region7: #{tpu_custom_call.1} parent=0 // loop_footer_branch
    %7 = sbr.rel target = $region3
  $region8: #{tpu_custom_call.1} parent=0 // loop_exit
    _

</llo_original>
